<compile_context>
chip_gen: v7x
topology: tpu7x:2x2x1
jax: 0.10.0
libtpu: 0.0.40
codegen_flags: <defaults>
</compile_context>

<pallas_src>
import jax
import jax.numpy as jnp
from jax.experimental import pallas as pl
from jax.experimental.pallas import tpu as pltpu

GRAD_CLIP = 0.1

_PALLAS_MIN_BYTES = 256 * 1024     # below this, skip Pallas (launch overhead wins)
_TARGET_BLOCK_BYTES = 4 << 20      # ~4 MiB per block: mem-bound sweet spot
_MAX_LANES = 1024                  # lane-dense last dim (multiple of 128)


def _grad_zero_kernel(g_ref, o_ref):
    g = g_ref[...]
    keep = jnp.abs(g) <= GRAD_CLIP           # NaN compares False -> zeroed too
    o_ref[...] = jnp.where(keep, g, jnp.zeros_like(g))


def _clip_xla(g):
    """Fused clamp for small / non-reshapeable cotangents (XLA fuses this)."""
    return jnp.where(jnp.abs(g) <= GRAD_CLIP, g, jnp.zeros_like(g))


def _pick_lanes(n):
    """Largest multiple-of-128 lane width that divides n exactly (pad-free)."""
    lanes = _MAX_LANES
    while lanes >= 128:
        if n % lanes == 0:
            return lanes
        lanes -= 128
    return None


def _grad_zero_backward(g):
    """NaN-zero + magnitude-clip, elementwise, via a tiled Pallas kernel."""
    shape, dtype = g.shape, g.dtype
    n = g.size
    itemsize = jnp.dtype(dtype).itemsize
    nbytes = n * itemsize

    # Small cotangents (e.g. dpvo-sized): Pallas launch + pipeline ramp
    # dominates; let XLA fuse the clamp into neighbouring backward ops.
    if nbytes < _PALLAS_MIN_BYTES:
        return _clip_xla(g)

    lanes = _pick_lanes(n)
    if lanes is None:
        # No pad-free lane-dense reshape exists; padding + slicing would
        # ~triple HBM traffic, so stay on the fused XLA expression.
        return _clip_xla(g)

    rows = n // lanes

    # ~4 MiB blocks, rows multiple of 8.
    tile_rows = max(8, (_TARGET_BLOCK_BYTES // (lanes * itemsize)) // 8 * 8)
    if rows <= tile_rows:
        # Split into (at least) 2 grid steps so the "parallel" axis can shard
        # across both TensorCores on v7x (harmless on 1-TC v5e/v6e).
        tile_rows = max(8, (((rows + 1) // 2) + 7) // 8 * 8)
    grid = pl.cdiv(rows, tile_rows)   # ragged final block handled by masking

    slab = g.reshape(rows, lanes)     # free: contiguous row-major reshape

    out = pl.pallas_call(
        _grad_zero_kernel,
        out_shape=jax.ShapeDtypeStruct((rows, lanes), dtype),
        grid=(grid,),
        in_specs=[pl.BlockSpec((tile_rows, lanes), lambda i: (i, 0))],
        out_specs=pl.BlockSpec((tile_rows, lanes), lambda i: (i, 0)),
        compiler_params=pltpu.CompilerParams(
            dimension_semantics=("parallel",),
            vmem_limit_bytes=32 << 20),
    )(slab)

    return out.reshape(shape)         # free reshape back; no slicing


# ------------------------ GradientZero module -------------------------------

@jax.custom_vjp
def gradient_zero(x):
    return x  # forward: identity (no kernel, no extra HBM traffic)


def _gradient_zero_fwd(x):
    return x, None


def _gradient_zero_bwd(_, g):
    return (_grad_zero_backward(g),)


gradient_zero.defvjp(_gradient_zero_fwd, _gradient_zero_bwd)


# ------------------------------- main ----------------------------------------

def _reference_clip(g):
    r = jnp.where(jnp.isnan(g), 0.0, g)
    return jnp.where(jnp.abs(r) > GRAD_CLIP, 0.0, r)


if __name__ == "__main__":
    k1, k2, k3, k4 = jax.random.split(jax.random.PRNGKey(0), 4)

    # --- small dpvo-sized input: forward identity + (XLA-bypass) backward ---
    x = jax.random.normal(k1, (2, 4, 16, 16), dtype=jnp.float32)  # NCHW
    y = jax.block_until_ready(gradient_zero(x))
    assert y.shape == x.shape and y.dtype == x.dtype
    assert jnp.allclose(y, x)

    g = jax.random.normal(k2, x.shape, dtype=jnp.float32)
    g = g.at[0, 0, 0, :4].set(jnp.nan)
    _, vjp_fn = jax.vjp(gradient_zero, x)
    (gx,) = vjp_fn(g)
    gx = jax.block_until_ready(gx)
    assert not jnp.any(jnp.isnan(gx))
    assert jnp.allclose(gx, _reference_clip(g), atol=0.0)

    # --- medium input: exercises the Pallas path (2-step parallel grid with a
    #     ragged, masked final block; rows=150, lanes=1024, tile_rows=80) ---
    x2 = jax.random.normal(k3, (150, 32, 32), dtype=jnp.float32)
    g2 = jax.random.normal(k4, x2.shape, dtype=jnp.float32)
    g2 = g2.at[0, 0, :8].set(jnp.nan)
    _, vjp_fn2 = jax.vjp(gradient_zero, x2)
    (gx2,) = vjp_fn2(g2)
    gx2 = jax.block_until_ready(gx2)
    assert not jnp.any(jnp.isnan(gx2))
    assert jnp.allclose(gx2, _reference_clip(g2), atol=0.0)

    # --- backward through jax.grad: cotangent at the output is the constant
    #     `c`, so the gradient is exactly clamp(c) (Pallas path again). ---
    c = 0.3 * jax.random.normal(jax.random.PRNGKey(5), x2.shape, jnp.float32)
    loss_grad = jax.grad(lambda a: jnp.sum(gradient_zero(a) * c))(x2)
    loss_grad = jax.block_until_ready(loss_grad)
    expected = jnp.where(jnp.abs(c) > GRAD_CLIP, 0.0, c)
    assert jnp.allclose(loss_grad, expected, atol=1e-6)

    print("KERNEL_OK")
</pallas_src>

<mosaic_0001>
module attributes {stable_mosaic.version = 11 : i64} {
  func.func @_grad_zero_kernel(%arg0: i32, %arg1: memref<80x1024xf32, #tpu.memory_space<vmem>>, %arg2: memref<80x1024xf32, #tpu.memory_space<vmem>>) attributes {dimension_semantics = [#tpu.dimension_semantics<parallel>], iteration_bounds = array<i64: 2>, scalar_prefetch = 0 : i64, scratch_operands = 0 : i64, tpu.core_type = #tpu.core_type<tc>, window_params = [{transform_indices = @transform_0, window_bounds = array<i64: 80, 1024>}, {transform_indices = @transform_1, window_bounds = array<i64: 80, 1024>}]} {
    %c0 = arith.constant 0 : index
    %c0_0 = arith.constant 0 : index
    %0 = vector.load %arg1[%c0, %c0_0] : memref<80x1024xf32, #tpu.memory_space<vmem>>, vector<80x1024xf32>
    %1 = math.absf %0 : vector<80x1024xf32>
    %cst = arith.constant 1.000000e-01 : f32
    %2 = vector.broadcast %cst : f32 to vector<80x1024xf32>
    %3 = arith.cmpf ole, %1, %2 : vector<80x1024xf32>
    %cst_1 = arith.constant 0.000000e+00 : f32
    %4 = vector.broadcast %cst_1 : f32 to vector<80x1024xf32>
    %5 = arith.select %3, %0, %4 : vector<80x1024xi1>, vector<80x1024xf32>
    %c0_2 = arith.constant 0 : index
    %c0_3 = arith.constant 0 : index
    %6 = vector.load %arg2[%c0_2, %c0_3] : memref<80x1024xf32, #tpu.memory_space<vmem>>, vector<80x1024xf32>
    tpu.vector_store %arg2[%c0_2, %c0_3], %5 {strides = array<i32>} : memref<80x1024xf32, #tpu.memory_space<vmem>>, vector<80x1024xf32>,
    return
  }
  func.func @transform_0(%arg0: i32) -> (i32, i32) {
    %c0_i32 = arith.constant 0 : i32
    %c0_i32_0 = arith.constant 0 : i32
    return %arg0, %c0_i32 : i32, i32
  }
  func.func @transform_1(%arg0: i32) -> (i32, i32) {
    %c0_i32 = arith.constant 0 : i32
    %c0_i32_0 = arith.constant 0 : i32
    return %arg0, %c0_i32 : i32, i32
  }
}

</mosaic_0001>

<llo_original>
// kernel: tpu_custom_call.1
$region0: #{tpu_custom_call.1}
  #allocation0 [shape = 'u32[]', space=smem, size = 0x4, offset = 0x4, fixed_abs, tag = 'smem constant byte address 0x4 - core index']
  #allocation1 [shape = 'u32[144,128]{1,0:T(1,128)}', space=vmem, size = 0x12000, scoped, tag = 'internal scratch']
  %s0 = inlined_call_operand.hbm [shape: f32[150,1024], index: 0, kind: input, shape index: {}]
  %s1 = inlined_call_operand.hbm [shape: f32[150,1024], index: 1, kind: output, shape index: {}]
  %s2 = sld [smem:[#allocation0]]
  $region41: #{tpu_custom_call.1} parent=0
    _
  %s4 = ssub.s32 1, %s2
  %s5 = scalar_select 0, %s4, %s2
  $region1: #{tpu_custom_call.1} parent=0
    #allocation2 [shape = 'u8[655360]{0}', space=vmem, size = 0xa0000, scoped, tag = 'input window, operand 0']
    #allocation3 [shape = 's32[2]{0}', space=sflag, size = 0x8, scoped, tag = 'scoped memory for tpu_custom_call.1']
    #allocation4 [shape = 's32[2]{0}', space=sflag, size = 0x8, scoped, tag = 'scoped memory for tpu_custom_call.1']
    #allocation5 [shape = 'u8[655360]{0}', space=vmem, size = 0xa0000, scoped, tag = 'output window, operand 0']
    %6 = vsyncpa [#allocation3], 0
    %s7 = scalar_lea.sflag [#allocation3], 1
    %8 = vsyncpa %s7, 0
    %9 = vsyncpa [#allocation4], 0
    %s10 = scalar_lea.sflag [#allocation4], 1
    %11 = vsyncpa %s10, 0
    loop: start=0, step=1, limit=4
    $region2: #{tpu_custom_call.1} parent=1 // loop_pre_header
      _
    $region3: #{tpu_custom_call.1} parent=1 // loop_header
      %s13 = sphi 0, %s17
      %p14 = scmp.ge.s32.totalorder %s13, 4
      %s23 = sphi 0, %s25
      %s26 = sphi 0, %s23
      %s27 = sphi 0, %s26
      %s43 = sphi 0, %s27
      %s49 = sphi 0, %s51
      %s52 = sphi 0, %s49
      %s53 = sphi 0, %s52
      %s69 = sphi 0, %s53
    $region4: #{tpu_custom_call.1} parent=1 // loop_header_branch
      %16 = sbr.rel (%p14) target = $region8
    $region5: #{tpu_custom_call.1} parent=1 // loop_body
      %s18 = ssub.s32 %s13, 1
      %s19 = ssub.s32 %s13, 2
      %s20 = sadd.s32 %s13, 1
      %s21 = ssub.s32 %s13, %s20
      %p22 = scmp.eq.s32.totalorder %s21, 0
      %s24 = sadd.s32 %s23, 1
      %s25 = scalar_select %p22, %s23, %s24
      %p28 = pneg %p22
      %p29 = scmp.eq.s32.totalorder %s13, 1
      %p30 = por %p28, %p29
      %p31 = scmp.ne.s32.totalorder %s23, %s26
      %p32 = scmp.eq.s32.totalorder %s13, 0
      %p33 = por %p31, %p32
      %p34 = scmp.ne.s32.totalorder %s23, %s26
      %p35 = scmp.eq.s32.totalorder %s18, 1
      %p36 = por %p34, %p35
      %p37 = scmp.ne.s32.totalorder %s26, %s27
      %p38 = scmp.eq.s32.totalorder %s18, 0
      %p39 = por %p37, %p38
      %p40 = scmp.ne.s32.totalorder %s26, %s27
      %p41 = scmp.eq.s32.totalorder %s19, 1
      %p42 = por %p40, %p41
      %p44 = scmp.ne.s32.totalorder %s27, %s43
      %p45 = scmp.eq.s32.totalorder %s19, 0
      %p46 = por %p44, %p45
      %s47 = ssub.s32 %s13, %s20
      %p48 = scmp.eq.s32.totalorder %s47, 0
      %s50 = sadd.s32 %s49, 1
      %s51 = scalar_select %p48, %s49, %s50
      %p54 = pneg %p48
      %p55 = scmp.eq.s32.totalorder %s13, 1
      %p56 = por %p54, %p55
      %p57 = scmp.ne.s32.totalorder %s49, %s52
      %p58 = scmp.eq.s32.totalorder %s13, 0
      %p59 = por %p57, %p58
      %p60 = scmp.ne.s32.totalorder %s49, %s52
      %p61 = scmp.eq.s32.totalorder %s18, 1
      %p62 = por %p60, %p61
      %p63 = scmp.ne.s32.totalorder %s52, %s53
      %p64 = scmp.eq.s32.totalorder %s18, 0
      %p65 = por %p63, %p64
      %p66 = scmp.ne.s32.totalorder %s52, %s53
      %p67 = scmp.eq.s32.totalorder %s19, 1
      %p68 = por %p66, %p67
      %p70 = scmp.ne.s32.totalorder %s53, %s69
      %p71 = scmp.eq.s32.totalorder %s19, 0
      %p72 = por %p70, %p71
      %p73 = scmp.le.s32.totalorder 1, %s13
      %p74 = scmp.lt.s32.totalorder %s13, 3
      %p75 = pnand %p73, %p74
      %p76 = pneg %p75
      // Predicated region
      $region9: #{tpu_custom_call.1} parent=5 // pred_check
        _
      $region10: #{tpu_custom_call.1} parent=5 // pred_check_branch
        %78 = sbr.rel (%p75) target = $region12
      $region11: #{tpu_custom_call.1} parent=5 // pred_region
        %s79 = ssub.s32 %s13, 1
      $region12: #{tpu_custom_call.1} parent=5 // pred_fallthru
        _
      %p80 = scmp.lt.s32.totalorder %s13, 2
      // Predicated region
      $region13: #{tpu_custom_call.1} parent=5 // pred_check
        %p81 = pneg %p80
      $region14: #{tpu_custom_call.1} parent=5 // pred_check_branch
        %83 = sbr.rel (%p81) target = $region16
      $region15: #{tpu_custom_call.1} parent=5 // pred_region
        // Predicated region
        $region17: #{tpu_custom_call.1} parent=15 // pred_check
          %p84 = pneg %p33
        $region18: #{tpu_custom_call.1} parent=15 // pred_check_branch
          %86 = sbr.rel (%p84) target = $region20
        $region19: #{tpu_custom_call.1} parent=15 // pred_region
          %s87 = sand.u32 %s23, 1
          %s88 = scalar_lea.sflag [#allocation3], %s87
          %s89 = sand.u32 %s23, 1
          %s90 = smul.addr %s89, 640
          %s91 = scalar_lea.vmem [#allocation2], %s90
          %s92 = smul.u32 10, %s13
          %s93 = ssub.s32 19, %s92
          %p94 = scmp.lt.s32.totalorder %s93, 10
          %s95 = scalar_select %p94, %s93, 10
          %s96 = smul.u32 128, %s95
          %s97 = smul.u32 %s96, 8
          %s99 = ssub.s32 10240, %s97
          %100 = vsyncadd %s88, %s99
          %p101 = scmp.ne.s32.totalorder 0, %s97
          %s102 = smul.addr %s92, 8
          %s103 = smul.addr %s102, 128
          %s104 = scalar_lea.hbm %s0, %s103
          %s105 = smul.u32 64, %s95
          %s106 = sshll.u32 %s91, 4
          %s107 = int_to_ptr.vmem [resolvable:$true] %s106
          %s108 = sshll.u32 %s105, 4
          %112 = dma.hbm_to_vmem [thread:$0]  (%p101), %s104, %s108, %s107, %s88, 1024, 1024, 64
        $region20: #{tpu_custom_call.1} parent=15 // pred_fallthru
          _
      $region16: #{tpu_custom_call.1} parent=5 // pred_fallthru
        _
      %p113 = scmp.le.s32.totalorder 1, %s13
      %p114 = scmp.lt.s32.totalorder %s13, 3
      %p115 = pnand %p113, %p114
      %p116 = pneg %p115
      // Predicated region
      $region21: #{tpu_custom_call.1} parent=5 // pred_check
        _
      $region22: #{tpu_custom_call.1} parent=5 // pred_check_branch
        %118 = sbr.rel (%p115) target = $region24
      $region23: #{tpu_custom_call.1} parent=5 // pred_region
        %s119 = ssub.s32 %s13, 1
        %s120 = sand.u32 %s26, 1
        %s121 = scalar_lea.sflag [#allocation3], %s120
        %s122 = sand.u32 %s26, 1
        %s123 = smul.addr %s122, 640
        %s124 = scalar_lea.vmem [#allocation2], %s123
        // Predicated region
        $region25: #{tpu_custom_call.1} parent=23 // pred_check
          %p125 = pneg %p39
        $region26: #{tpu_custom_call.1} parent=23 // pred_check_branch
          %127 = sbr.rel (%p125) target = $region28
        $region27: #{tpu_custom_call.1} parent=23 // pred_region
          %128 = dma.done %s121, 10240
        $region28: #{tpu_custom_call.1} parent=23 // pred_fallthru
          _
        %s129 = sand.u32 %s26, 1
        %s130 = scalar_lea.sflag [#allocation3], %s129
        %s131 = sand.u32 %s26, 1
        %s132 = smul.addr %s131, 640
        %s133 = scalar_lea.vmem [#allocation2], %s132
        %p134 = pneg %p39
        %p135 = pneg %p36
        %p136 = pneg %p65
        %p137 = pneg %p62
        %s138 = sand.u32 %s52, 1
        %s139 = scalar_lea.sflag [#allocation4], %s138
        %s140 = sand.u32 %s52, 1
        %s141 = smul.addr %s140, 640
        %s142 = scalar_lea.vmem [#allocation5], %s141
        %s143 = smul.u32 10, %s18
        %s144 = ssub.s32 19, %s143
        %p145 = scmp.lt.s32.totalorder %s144, 10
        %s146 = scalar_select %p145, %s144, 10
        %s147 = smul.u32 128, %s146
        %s148 = smul.u32 %s147, 8
        %s149 = smul.u32 10, %s18
        %s150 = ssub.s32 19, %s149
        %p151 = scmp.lt.s32.totalorder %s150, 10
        %s152 = scalar_select %p151, %s150, 10
        %s153 = smul.u32 128, %s152
        %s154 = smul.u32 %s153, 8
        %v155 = vld [vmem:[%s124] sm:$0xff]
        %v156 = vld [vmem:[%s124 + $0x8] sm:$0xff]
        %v157 = vld [vmem:[%s124 + $0x10] sm:$0xff]
        %v158 = vld [vmem:[%s124 + $0x18] sm:$0xff]
        %v159 = vld [vmem:[%s124 + $0x20] sm:$0xff]
        %v160 = vld [vmem:[%s124 + $0x28] sm:$0xff]
        %v161 = vld [vmem:[%s124 + $0x30] sm:$0xff]
        %v162 = vld [vmem:[%s124 + $0x38] sm:$0xff]
        %v163 = vld [vmem:[%s124 + $0x40] sm:$0xff]
        %v164 = vld [vmem:[%s124 + $0x48] sm:$0xff]
        %v165 = vld [vmem:[%s124 + $0x50] sm:$0xff]
        %v166 = vld [vmem:[%s124 + $0x58] sm:$0xff]
        %v167 = vld [vmem:[%s124 + $0x60] sm:$0xff]
        %v168 = vld [vmem:[%s124 + $0x68] sm:$0xff]
        %v169 = vld [vmem:[%s124 + $0x70] sm:$0xff]
        %v170 = vld [vmem:[%s124 + $0x78] sm:$0xff]
        %v171 = vld [vmem:[%s124 + $0x80] sm:$0xff]
        %v172 = vld [vmem:[%s124 + $0x88] sm:$0xff]
        %v173 = vld [vmem:[%s124 + $0x90] sm:$0xff]
        %v174 = vld [vmem:[%s124 + $0x98] sm:$0xff]
        %v175 = vld [vmem:[%s124 + $0xa0] sm:$0xff]
        %v176 = vld [vmem:[%s124 + $0xa8] sm:$0xff]
        %v177 = vld [vmem:[%s124 + $0xb0] sm:$0xff]
        %v178 = vld [vmem:[%s124 + $0xb8] sm:$0xff]
        %v179 = vld [vmem:[%s124 + $0xc0] sm:$0xff]
        %v180 = vld [vmem:[%s124 + $0xc8] sm:$0xff]
        %v181 = vld [vmem:[%s124 + $0xd0] sm:$0xff]
        %v182 = vld [vmem:[%s124 + $0xd8] sm:$0xff]
        %v183 = vld [vmem:[%s124 + $0xe0] sm:$0xff]
        %v184 = vld [vmem:[%s124 + $0xe8] sm:$0xff]
        %v185 = vld [vmem:[%s124 + $0xf0] sm:$0xff]
        %v186 = vld [vmem:[%s124 + $0xf8] sm:$0xff]
        %v187 = vld [vmem:[%s124 + $0x100] sm:$0xff]
        %v188 = vld [vmem:[%s124 + $0x108] sm:$0xff]
        %v189 = vld [vmem:[%s124 + $0x110] sm:$0xff]
        %v190 = vld [vmem:[%s124 + $0x118] sm:$0xff]
        %v191 = vld [vmem:[%s124 + $0x120] sm:$0xff]
        %v192 = vld [vmem:[%s124 + $0x128] sm:$0xff]
        %v193 = vld [vmem:[%s124 + $0x130] sm:$0xff]
        %v194 = vld [vmem:[%s124 + $0x138] sm:$0xff]
        %v195 = vld [vmem:[%s124 + $0x140] sm:$0xff]
        %v196 = vld [vmem:[%s124 + $0x148] sm:$0xff]
        %v197 = vld [vmem:[%s124 + $0x150] sm:$0xff]
        %v198 = vld [vmem:[%s124 + $0x158] sm:$0xff]
        %v199 = vld [vmem:[%s124 + $0x160] sm:$0xff]
        %v200 = vld [vmem:[%s124 + $0x168] sm:$0xff]
        %v201 = vld [vmem:[%s124 + $0x170] sm:$0xff]
        %v202 = vld [vmem:[%s124 + $0x178] sm:$0xff]
        %v203 = vld [vmem:[%s124 + $0x180] sm:$0xff]
        %v204 = vld [vmem:[%s124 + $0x188] sm:$0xff]
        %v205 = vld [vmem:[%s124 + $0x190] sm:$0xff]
        %v206 = vld [vmem:[%s124 + $0x198] sm:$0xff]
        %v207 = vld [vmem:[%s124 + $0x1a0] sm:$0xff]
        %v208 = vld [vmem:[%s124 + $0x1a8] sm:$0xff]
        %v209 = vld [vmem:[%s124 + $0x1b0] sm:$0xff]
        %v210 = vld [vmem:[%s124 + $0x1b8] sm:$0xff]
        %v211 = vld [vmem:[%s124 + $0x1c0] sm:$0xff]
        %v212 = vld [vmem:[%s124 + $0x1c8] sm:$0xff]
        %v213 = vld [vmem:[%s124 + $0x1d0] sm:$0xff]
        %v214 = vld [vmem:[%s124 + $0x1d8] sm:$0xff]
        %v215 = vld [vmem:[%s124 + $0x1e0] sm:$0xff]
        %v216 = vld [vmem:[%s124 + $0x1e8] sm:$0xff]
        %v217 = vld [vmem:[%s124 + $0x1f0] sm:$0xff]
        %v218 = vld [vmem:[%s124 + $0x1f8] sm:$0xff]
        %v219 = vld [vmem:[%s124 + $0x200] sm:$0xff]
        %v220 = vld [vmem:[%s124 + $0x208] sm:$0xff]
        %v221 = vld [vmem:[%s124 + $0x210] sm:$0xff]
        %v222 = vld [vmem:[%s124 + $0x218] sm:$0xff]
        %v223 = vld [vmem:[%s124 + $0x220] sm:$0xff]
        %v224 = vld [vmem:[%s124 + $0x228] sm:$0xff]
        %v225 = vld [vmem:[%s124 + $0x230] sm:$0xff]
        %v226 = vld [vmem:[%s124 + $0x238] sm:$0xff]
        %v227 = vld [vmem:[%s124 + $0x240] sm:$0xff]
        %v228 = vld [vmem:[%s124 + $0x248] sm:$0xff]
        %v229 = vld [vmem:[%s124 + $0x250] sm:$0xff]
        %v230 = vld [vmem:[%s124 + $0x258] sm:$0xff]
        %v231 = vld [vmem:[%s124 + $0x260] sm:$0xff]
        %v232 = vld [vmem:[%s124 + $0x268] sm:$0xff]
        %v233 = vld [vmem:[%s124 + $0x270] sm:$0xff]
        %v234 = vld [vmem:[%s124 + $0x278] sm:$0xff]
        %v235 = vand.u32 2147483647, %v155
        %v236 = vand.u32 2147483647, %v156
        %v237 = vand.u32 2147483647, %v157
        %v238 = vand.u32 2147483647, %v158
        %v239 = vand.u32 2147483647, %v159
        %v240 = vand.u32 2147483647, %v160
        %v241 = vand.u32 2147483647, %v161
        %v242 = vand.u32 2147483647, %v162
        %v243 = vand.u32 2147483647, %v163
        %v244 = vand.u32 2147483647, %v164
        %v245 = vand.u32 2147483647, %v165
        %v246 = vand.u32 2147483647, %v166
        %v247 = vand.u32 2147483647, %v167
        %v248 = vand.u32 2147483647, %v168
        %v249 = vand.u32 2147483647, %v169
        %v250 = vand.u32 2147483647, %v170
        %v251 = vand.u32 2147483647, %v171
        %v252 = vand.u32 2147483647, %v172
        %v253 = vand.u32 2147483647, %v173
        %v254 = vand.u32 2147483647, %v174
        %v255 = vand.u32 2147483647, %v175
        %v256 = vand.u32 2147483647, %v176
        %v257 = vand.u32 2147483647, %v177
        %v258 = vand.u32 2147483647, %v178
        %v259 = vand.u32 2147483647, %v179
        %v260 = vand.u32 2147483647, %v180
        %v261 = vand.u32 2147483647, %v181
        %v262 = vand.u32 2147483647, %v182
        %v263 = vand.u32 2147483647, %v183
        %v264 = vand.u32 2147483647, %v184
        %v265 = vand.u32 2147483647, %v185
        %v266 = vand.u32 2147483647, %v186
        %v267 = vand.u32 2147483647, %v187
        %v268 = vand.u32 2147483647, %v188
        %v269 = vand.u32 2147483647, %v189
        %v270 = vand.u32 2147483647, %v190
        %v271 = vand.u32 2147483647, %v191
        %v272 = vand.u32 2147483647, %v192
        %v273 = vand.u32 2147483647, %v193
        %v274 = vand.u32 2147483647, %v194
        %v275 = vand.u32 2147483647, %v195
        %v276 = vand.u32 2147483647, %v196
        %v277 = vand.u32 2147483647, %v197
        %v278 = vand.u32 2147483647, %v198
        %v279 = vand.u32 2147483647, %v199
        %v280 = vand.u32 2147483647, %v200
        %v281 = vand.u32 2147483647, %v201
        %v282 = vand.u32 2147483647, %v202
        %v283 = vand.u32 2147483647, %v203
        %v284 = vand.u32 2147483647, %v204
        %v285 = vand.u32 2147483647, %v205
        %v286 = vand.u32 2147483647, %v206
        %v287 = vand.u32 2147483647, %v207
        %v288 = vand.u32 2147483647, %v208
        %v289 = vand.u32 2147483647, %v209
        %v290 = vand.u32 2147483647, %v210
        %v291 = vand.u32 2147483647, %v211
        %v292 = vand.u32 2147483647, %v212
        %v293 = vand.u32 2147483647, %v213
        %v294 = vand.u32 2147483647, %v214
        %v295 = vand.u32 2147483647, %v215
        %v296 = vand.u32 2147483647, %v216
        %v297 = vand.u32 2147483647, %v217
        %v298 = vand.u32 2147483647, %v218
        %v299 = vand.u32 2147483647, %v219
        %v300 = vand.u32 2147483647, %v220
        %v301 = vand.u32 2147483647, %v221
        %v302 = vand.u32 2147483647, %v222
        %v303 = vand.u32 2147483647, %v223
        %v304 = vand.u32 2147483647, %v224
        %v305 = vand.u32 2147483647, %v225
        %v306 = vand.u32 2147483647, %v226
        %v307 = vand.u32 2147483647, %v227
        %v308 = vand.u32 2147483647, %v228
        %v309 = vand.u32 2147483647, %v229
        %v310 = vand.u32 2147483647, %v230
        %v311 = vand.u32 2147483647, %v231
        %v312 = vand.u32 2147483647, %v232
        %v313 = vand.u32 2147483647, %v233
        %v314 = vand.u32 2147483647, %v234
        %vm315 = vcmp.le.f32.partialorder %v235, 0.1
        %vm316 = vcmp.le.f32.partialorder %v236, 0.1
        %vm317 = vcmp.le.f32.partialorder %v237, 0.1
        %vm318 = vcmp.le.f32.partialorder %v238, 0.1
        %vm319 = vcmp.le.f32.partialorder %v239, 0.1
        %vm320 = vcmp.le.f32.partialorder %v240, 0.1
        %vm321 = vcmp.le.f32.partialorder %v241, 0.1
        %vm322 = vcmp.le.f32.partialorder %v242, 0.1
        %vm323 = vcmp.le.f32.partialorder %v243, 0.1
        %vm324 = vcmp.le.f32.partialorder %v244, 0.1
        %vm325 = vcmp.le.f32.partialorder %v245, 0.1
        %vm326 = vcmp.le.f32.partialorder %v246, 0.1
        %vm327 = vcmp.le.f32.partialorder %v247, 0.1
        %vm328 = vcmp.le.f32.partialorder %v248, 0.1
        %vm329 = vcmp.le.f32.partialorder %v249, 0.1
        %vm330 = vcmp.le.f32.partialorder %v250, 0.1
        %vm331 = vcmp.le.f32.partialorder %v251, 0.1
        %vm332 = vcmp.le.f32.partialorder %v252, 0.1
        %vm333 = vcmp.le.f32.partialorder %v253, 0.1
        %vm334 = vcmp.le.f32.partialorder %v254, 0.1
        %vm335 = vcmp.le.f32.partialorder %v255, 0.1
        %vm336 = vcmp.le.f32.partialorder %v256, 0.1
        %vm337 = vcmp.le.f32.partialorder %v257, 0.1
        %vm338 = vcmp.le.f32.partialorder %v258, 0.1
        %vm339 = vcmp.le.f32.partialorder %v259, 0.1
        %vm340 = vcmp.le.f32.partialorder %v260, 0.1
        %vm341 = vcmp.le.f32.partialorder %v261, 0.1
        %vm342 = vcmp.le.f32.partialorder %v262, 0.1
        %vm343 = vcmp.le.f32.partialorder %v263, 0.1
        %vm344 = vcmp.le.f32.partialorder %v264, 0.1
        %vm345 = vcmp.le.f32.partialorder %v265, 0.1
        %vm346 = vcmp.le.f32.partialorder %v266, 0.1
        %vm347 = vcmp.le.f32.partialorder %v267, 0.1
        %vm348 = vcmp.le.f32.partialorder %v268, 0.1
        %vm349 = vcmp.le.f32.partialorder %v269, 0.1
        %vm350 = vcmp.le.f32.partialorder %v270, 0.1
        %vm351 = vcmp.le.f32.partialorder %v271, 0.1
        %vm352 = vcmp.le.f32.partialorder %v272, 0.1
        %vm353 = vcmp.le.f32.partialorder %v273, 0.1
        %vm354 = vcmp.le.f32.partialorder %v274, 0.1
        %vm355 = vcmp.le.f32.partialorder %v275, 0.1
        %vm356 = vcmp.le.f32.partialorder %v276, 0.1
        %vm357 = vcmp.le.f32.partialorder %v277, 0.1
        %vm358 = vcmp.le.f32.partialorder %v278, 0.1
        %vm359 = vcmp.le.f32.partialorder %v279, 0.1
        %vm360 = vcmp.le.f32.partialorder %v280, 0.1
        %vm361 = vcmp.le.f32.partialorder %v281, 0.1
        %vm362 = vcmp.le.f32.partialorder %v282, 0.1
        %vm363 = vcmp.le.f32.partialorder %v283, 0.1
        %vm364 = vcmp.le.f32.partialorder %v284, 0.1
        %vm365 = vcmp.le.f32.partialorder %v285, 0.1
        %vm366 = vcmp.le.f32.partialorder %v286, 0.1
        %vm367 = vcmp.le.f32.partialorder %v287, 0.1
        %vm368 = vcmp.le.f32.partialorder %v288, 0.1
        %vm369 = vcmp.le.f32.partialorder %v289, 0.1
        %vm370 = vcmp.le.f32.partialorder %v290, 0.1
        %vm371 = vcmp.le.f32.partialorder %v291, 0.1
        %vm372 = vcmp.le.f32.partialorder %v292, 0.1
        %vm373 = vcmp.le.f32.partialorder %v293, 0.1
        %vm374 = vcmp.le.f32.partialorder %v294, 0.1
        %vm375 = vcmp.le.f32.partialorder %v295, 0.1
        %vm376 = vcmp.le.f32.partialorder %v296, 0.1
        %vm377 = vcmp.le.f32.partialorder %v297, 0.1
        %vm378 = vcmp.le.f32.partialorder %v298, 0.1
        %vm379 = vcmp.le.f32.partialorder %v299, 0.1
        %vm380 = vcmp.le.f32.partialorder %v300, 0.1
        %vm381 = vcmp.le.f32.partialorder %v301, 0.1
        %vm382 = vcmp.le.f32.partialorder %v302, 0.1
        %vm383 = vcmp.le.f32.partialorder %v303, 0.1
        %vm384 = vcmp.le.f32.partialorder %v304, 0.1
        %vm385 = vcmp.le.f32.partialorder %v305, 0.1
        %vm386 = vcmp.le.f32.partialorder %v306, 0.1
        %vm387 = vcmp.le.f32.partialorder %v307, 0.1
        %vm388 = vcmp.le.f32.partialorder %v308, 0.1
        %vm389 = vcmp.le.f32.partialorder %v309, 0.1
        %vm390 = vcmp.le.f32.partialorder %v310, 0.1
        %vm391 = vcmp.le.f32.partialorder %v311, 0.1
        %vm392 = vcmp.le.f32.partialorder %v312, 0.1
        %vm393 = vcmp.le.f32.partialorder %v313, 0.1
        %vm394 = vcmp.le.f32.partialorder %v314, 0.1
        %v395 = vsel %vm315, %v155, 0.0
        %v396 = vsel %vm316, %v156, 0.0
        %v397 = vsel %vm317, %v157, 0.0
        %v398 = vsel %vm318, %v158, 0.0
        %v399 = vsel %vm319, %v159, 0.0
        %v400 = vsel %vm320, %v160, 0.0
        %v401 = vsel %vm321, %v161, 0.0
        %v402 = vsel %vm322, %v162, 0.0
        %v403 = vsel %vm323, %v163, 0.0
        %v404 = vsel %vm324, %v164, 0.0
        %v405 = vsel %vm325, %v165, 0.0
        %v406 = vsel %vm326, %v166, 0.0
        %v407 = vsel %vm327, %v167, 0.0
        %v408 = vsel %vm328, %v168, 0.0
        %v409 = vsel %vm329, %v169, 0.0
        %v410 = vsel %vm330, %v170, 0.0
        %v411 = vsel %vm331, %v171, 0.0
        %v412 = vsel %vm332, %v172, 0.0
        %v413 = vsel %vm333, %v173, 0.0
        %v414 = vsel %vm334, %v174, 0.0
        %v415 = vsel %vm335, %v175, 0.0
        %v416 = vsel %vm336, %v176, 0.0
        %v417 = vsel %vm337, %v177, 0.0
        %v418 = vsel %vm338, %v178, 0.0
        %v419 = vsel %vm339, %v179, 0.0
        %v420 = vsel %vm340, %v180, 0.0
        %v421 = vsel %vm341, %v181, 0.0
        %v422 = vsel %vm342, %v182, 0.0
        %v423 = vsel %vm343, %v183, 0.0
        %v424 = vsel %vm344, %v184, 0.0
        %v425 = vsel %vm345, %v185, 0.0
        %v426 = vsel %vm346, %v186, 0.0
        %v427 = vsel %vm347, %v187, 0.0
        %v428 = vsel %vm348, %v188, 0.0
        %v429 = vsel %vm349, %v189, 0.0
        %v430 = vsel %vm350, %v190, 0.0
        %v431 = vsel %vm351, %v191, 0.0
        %v432 = vsel %vm352, %v192, 0.0
        %v433 = vsel %vm353, %v193, 0.0
        %v434 = vsel %vm354, %v194, 0.0
        %v435 = vsel %vm355, %v195, 0.0
        %v436 = vsel %vm356, %v196, 0.0
        %v437 = vsel %vm357, %v197, 0.0
        %v438 = vsel %vm358, %v198, 0.0
        %v439 = vsel %vm359, %v199, 0.0
        %v440 = vsel %vm360, %v200, 0.0
        %v441 = vsel %vm361, %v201, 0.0
        %v442 = vsel %vm362, %v202, 0.0
        %v443 = vsel %vm363, %v203, 0.0
        %v444 = vsel %vm364, %v204, 0.0
        %v445 = vsel %vm365, %v205, 0.0
        %v446 = vsel %vm366, %v206, 0.0
        %v447 = vsel %vm367, %v207, 0.0
        %v448 = vsel %vm368, %v208, 0.0
        %v449 = vsel %vm369, %v209, 0.0
        %v450 = vsel %vm370, %v210, 0.0
        %v451 = vsel %vm371, %v211, 0.0
        %v452 = vsel %vm372, %v212, 0.0
        %v453 = vsel %vm373, %v213, 0.0
        %v454 = vsel %vm374, %v214, 0.0
        %v455 = vsel %vm375, %v215, 0.0
        %v456 = vsel %vm376, %v216, 0.0
        %v457 = vsel %vm377, %v217, 0.0
        %v458 = vsel %vm378, %v218, 0.0
        %v459 = vsel %vm379, %v219, 0.0
        %v460 = vsel %vm380, %v220, 0.0
        %v461 = vsel %vm381, %v221, 0.0
        %v462 = vsel %vm382, %v222, 0.0
        %v463 = vsel %vm383, %v223, 0.0
        %v464 = vsel %vm384, %v224, 0.0
        %v465 = vsel %vm385, %v225, 0.0
        %v466 = vsel %vm386, %v226, 0.0
        %v467 = vsel %vm387, %v227, 0.0
        %v468 = vsel %vm388, %v228, 0.0
        %v469 = vsel %vm389, %v229, 0.0
        %v470 = vsel %vm390, %v230, 0.0
        %v471 = vsel %vm391, %v231, 0.0
        %v472 = vsel %vm392, %v232, 0.0
        %v473 = vsel %vm393, %v233, 0.0
        %v474 = vsel %vm394, %v234, 0.0
        %475 = vst [vmem:[%s142] sm:$0xff] %v395
        %476 = vst [vmem:[%s142 + $0x8] sm:$0xff] %v396
        %477 = vst [vmem:[%s142 + $0x10] sm:$0xff] %v397
        %478 = vst [vmem:[%s142 + $0x18] sm:$0xff] %v398
        %479 = vst [vmem:[%s142 + $0x20] sm:$0xff] %v399
        %480 = vst [vmem:[%s142 + $0x28] sm:$0xff] %v400
        %481 = vst [vmem:[%s142 + $0x30] sm:$0xff] %v401
        %482 = vst [vmem:[%s142 + $0x38] sm:$0xff] %v402
        %483 = vst [vmem:[%s142 + $0x40] sm:$0xff] %v403
        %484 = vst [vmem:[%s142 + $0x48] sm:$0xff] %v404
        %485 = vst [vmem:[%s142 + $0x50] sm:$0xff] %v405
        %486 = vst [vmem:[%s142 + $0x58] sm:$0xff] %v406
        %487 = vst [vmem:[%s142 + $0x60] sm:$0xff] %v407
        %488 = vst [vmem:[%s142 + $0x68] sm:$0xff] %v408
        %489 = vst [vmem:[%s142 + $0x70] sm:$0xff] %v409
        %490 = vst [vmem:[%s142 + $0x78] sm:$0xff] %v410
        %491 = vst [vmem:[%s142 + $0x80] sm:$0xff] %v411
        %492 = vst [vmem:[%s142 + $0x88] sm:$0xff] %v412
        %493 = vst [vmem:[%s142 + $0x90] sm:$0xff] %v413
        %494 = vst [vmem:[%s142 + $0x98] sm:$0xff] %v414
        %495 = vst [vmem:[%s142 + $0xa0] sm:$0xff] %v415
        %496 = vst [vmem:[%s142 + $0xa8] sm:$0xff] %v416
        %497 = vst [vmem:[%s142 + $0xb0] sm:$0xff] %v417
        %498 = vst [vmem:[%s142 + $0xb8] sm:$0xff] %v418
        %499 = vst [vmem:[%s142 + $0xc0] sm:$0xff] %v419
        %500 = vst [vmem:[%s142 + $0xc8] sm:$0xff] %v420
        %501 = vst [vmem:[%s142 + $0xd0] sm:$0xff] %v421
        %502 = vst [vmem:[%s142 + $0xd8] sm:$0xff] %v422
        %503 = vst [vmem:[%s142 + $0xe0] sm:$0xff] %v423
        %504 = vst [vmem:[%s142 + $0xe8] sm:$0xff] %v424
        %505 = vst [vmem:[%s142 + $0xf0] sm:$0xff] %v425
        %506 = vst [vmem:[%s142 + $0xf8] sm:$0xff] %v426
        %507 = vst [vmem:[%s142 + $0x100] sm:$0xff] %v427
        %508 = vst [vmem:[%s142 + $0x108] sm:$0xff] %v428
        %509 = vst [vmem:[%s142 + $0x110] sm:$0xff] %v429
        %510 = vst [vmem:[%s142 + $0x118] sm:$0xff] %v430
        %511 = vst [vmem:[%s142 + $0x120] sm:$0xff] %v431
        %512 = vst [vmem:[%s142 + $0x128] sm:$0xff] %v432
        %513 = vst [vmem:[%s142 + $0x130] sm:$0xff] %v433
        %514 = vst [vmem:[%s142 + $0x138] sm:$0xff] %v434
        %515 = vst [vmem:[%s142 + $0x140] sm:$0xff] %v435
        %516 = vst [vmem:[%s142 + $0x148] sm:$0xff] %v436
        %517 = vst [vmem:[%s142 + $0x150] sm:$0xff] %v437
        %518 = vst [vmem:[%s142 + $0x158] sm:$0xff] %v438
        %519 = vst [vmem:[%s142 + $0x160] sm:$0xff] %v439
        %520 = vst [vmem:[%s142 + $0x168] sm:$0xff] %v440
        %521 = vst [vmem:[%s142 + $0x170] sm:$0xff] %v441
        %522 = vst [vmem:[%s142 + $0x178] sm:$0xff] %v442
        %523 = vst [vmem:[%s142 + $0x180] sm:$0xff] %v443
        %524 = vst [vmem:[%s142 + $0x188] sm:$0xff] %v444
        %525 = vst [vmem:[%s142 + $0x190] sm:$0xff] %v445
        %526 = vst [vmem:[%s142 + $0x198] sm:$0xff] %v446
        %527 = vst [vmem:[%s142 + $0x1a0] sm:$0xff] %v447
        %528 = vst [vmem:[%s142 + $0x1a8] sm:$0xff] %v448
        %529 = vst [vmem:[%s142 + $0x1b0] sm:$0xff] %v449
        %530 = vst [vmem:[%s142 + $0x1b8] sm:$0xff] %v450
        %531 = vst [vmem:[%s142 + $0x1c0] sm:$0xff] %v451
        %532 = vst [vmem:[%s142 + $0x1c8] sm:$0xff] %v452
        %533 = vst [vmem:[%s142 + $0x1d0] sm:$0xff] %v453
        %534 = vst [vmem:[%s142 + $0x1d8] sm:$0xff] %v454
        %535 = vst [vmem:[%s142 + $0x1e0] sm:$0xff] %v455
        %536 = vst [vmem:[%s142 + $0x1e8] sm:$0xff] %v456
        %537 = vst [vmem:[%s142 + $0x1f0] sm:$0xff] %v457
        %538 = vst [vmem:[%s142 + $0x1f8] sm:$0xff] %v458
        %539 = vst [vmem:[%s142 + $0x200] sm:$0xff] %v459
        %540 = vst [vmem:[%s142 + $0x208] sm:$0xff] %v460
        %541 = vst [vmem:[%s142 + $0x210] sm:$0xff] %v461
        %542 = vst [vmem:[%s142 + $0x218] sm:$0xff] %v462
        %543 = vst [vmem:[%s142 + $0x220] sm:$0xff] %v463
        %544 = vst [vmem:[%s142 + $0x228] sm:$0xff] %v464
        %545 = vst [vmem:[%s142 + $0x230] sm:$0xff] %v465
        %546 = vst [vmem:[%s142 + $0x238] sm:$0xff] %v466
        %547 = vst [vmem:[%s142 + $0x240] sm:$0xff] %v467
        %548 = vst [vmem:[%s142 + $0x248] sm:$0xff] %v468
        %549 = vst [vmem:[%s142 + $0x250] sm:$0xff] %v469
        %550 = vst [vmem:[%s142 + $0x258] sm:$0xff] %v470
        %551 = vst [vmem:[%s142 + $0x260] sm:$0xff] %v471
        %552 = vst [vmem:[%s142 + $0x268] sm:$0xff] %v472
        %553 = vst [vmem:[%s142 + $0x270] sm:$0xff] %v473
        %554 = vst [vmem:[%s142 + $0x278] sm:$0xff] %v474
        %s555 = sand.u32 %s52, 1
        %s556 = scalar_lea.sflag [#allocation4], %s555
        %s557 = sand.u32 %s52, 1
        %s558 = smul.addr %s557, 640
        %s559 = scalar_lea.vmem [#allocation5], %s558
        // Predicated region
        $region29: #{tpu_custom_call.1} parent=23 // pred_check
          %p560 = pneg %p62
        $region30: #{tpu_custom_call.1} parent=23 // pred_check_branch
          %562 = sbr.rel (%p560) target = $region32
        $region31: #{tpu_custom_call.1} parent=23 // pred_region
          %s563 = smul.u32 10, %s18
          %s564 = ssub.s32 19, %s563
          %p565 = scmp.lt.s32.totalorder %s564, 10
          %s566 = scalar_select %p565, %s564, 10
          %s567 = smul.u32 128, %s566
          %s568 = smul.u32 %s567, 8
          %s570 = ssub.s32 10240, %s568
          %571 = vsyncadd %s556, %s570
          %p572 = scmp.ne.s32.totalorder 0, %s568
          %s573 = smul.addr %s563, 8
          %s574 = smul.addr %s573, 128
          %s575 = scalar_lea.hbm %s1, %s574
          %s576 = smul.u32 64, %s566
          %s577 = sshll.u32 %s559, 4
          %s578 = int_to_ptr.vmem [resolvable:$true] %s577
          %s579 = sshll.u32 %s576, 4
          %583 = dma.vmem_to_hbm [thread:$0]  (%p572), %s578, %s579, %s575, %s556, 1024, 1024, 64
        $region32: #{tpu_custom_call.1} parent=23 // pred_fallthru
          _
      $region24: #{tpu_custom_call.1} parent=5 // pred_fallthru
        _
      %p584 = scmp.le.s32.totalorder 2, %s13
      // Predicated region
      $region33: #{tpu_custom_call.1} parent=5 // pred_check
        %p585 = pneg %p584
      $region34: #{tpu_custom_call.1} parent=5 // pred_check_branch
        %587 = sbr.rel (%p585) target = $region36
      $region35: #{tpu_custom_call.1} parent=5 // pred_region
        %s588 = ssub.s32 %s13, 2
        // Predicated region
        $region37: #{tpu_custom_call.1} parent=35 // pred_check
          %p589 = pneg %p68
        $region38: #{tpu_custom_call.1} parent=35 // pred_check_branch
          %591 = sbr.rel (%p589) target = $region40
        $region39: #{tpu_custom_call.1} parent=35 // pred_region
          %s592 = sand.u32 %s53, 1
          %s593 = scalar_lea.sflag [#allocation4], %s592
          %s594 = sand.u32 %s53, 1
          %s595 = smul.addr %s594, 640
          %s596 = scalar_lea.vmem [#allocation5], %s595
          %597 = dma.done %s593, 10240
        $region40: #{tpu_custom_call.1} parent=35 // pred_fallthru
          _
      $region36: #{tpu_custom_call.1} parent=5 // pred_fallthru
        _
    $region6: #{tpu_custom_call.1} parent=1 // loop_footer
      %s17 = sadd.s32 1, %s13
    $region7: #{tpu_custom_call.1} parent=1 // loop_footer_branch
      %12 = sbr.rel target = $region3
    $region8: #{tpu_custom_call.1} parent=1 // loop_exit
      _
    %598 = vsyncpa [#allocation3], 1
    %s599 = scalar_lea.sflag [#allocation3], 1
    %600 = vsyncpa %s599, 1
    %601 = vsyncpa [#allocation4], 1
    %s602 = scalar_lea.sflag [#allocation4], 1
    %603 = vsyncpa %s602, 1

</llo_original>
